<compile_context>
chip_gen: v7x
topology: tpu7x:2x2x1
jax: 0.10.0
libtpu: 0.0.40
codegen_flags: <defaults>
</compile_context>

<pallas_src>
import jax
import jax.numpy as jnp
from jax.experimental import pallas as pl
from jax.experimental.pallas import tpu as pltpu


def _round_up(x, m):
    return ((x + m - 1) // m) * m


def _fused_proj_kernel(x_ref, w_ref, b_ref, o_ref):
    # x_ref: (TM, C)      row tile of the flattened input (input dtype)
    # w_ref: (C,  TN)     tile (or whole) of the fused weight  Wq^T @ Wo^T
    # b_ref: (1,  TN)     fused bias tile  bq @ Wo^T + bo   (f32)
    # o_ref: (TM, TN)     output tile
    x = x_ref[...].astype(w_ref.dtype)          # cast once, in-kernel (no-op if same dtype)
    acc = jnp.dot(x, w_ref[...], preferred_element_type=jnp.float32)
    o_ref[...] = (acc + b_ref[...]).astype(o_ref.dtype)


def fuse_ait_mha_params(params, *, mxu_dtype=jnp.bfloat16):
    """One-time algebraic fusion of the two linears.  Call ONCE per weight set.

    out = x @ (Wq^T Wo^T) + (bq Wo^T + bo).
    Only the output (N) axis is padded to a multiple of 128 for lane-dense
    stores; the contraction axis stays at its natural size.
    """
    wq_t = params["wq"].astype(jnp.float32).T            # (C, C) in -> out
    wo_t = params["wo"].astype(jnp.float32).T            # (C, C)
    w = wq_t @ wo_t                                       # (C, C)
    b = params["bq"].astype(jnp.float32) @ wo_t + params["bo"].astype(jnp.float32)
    c = w.shape[0]
    n_pad = _round_up(c, 128)
    if n_pad != c:
        w = jnp.pad(w, ((0, 0), (0, n_pad - c)))
        b = jnp.pad(b, ((0, n_pad - c),))
    return {
        "w": w.astype(mxu_dtype),          # (C, n_pad)
        "b": b.reshape(1, n_pad),          # (1, n_pad) f32
        "n_state": c,
    }


def ait_mha_forward(x, xa, fused, *, max_row_tile=1024):
    """Forward of AITMultiHeadAttention: returns out_proj(query_proj(x)).

    `xa` only feeds the (dead) key/value projections of the reference module
    and does not influence the returned value; it is ignored here.
    """
    del xa
    B, T, C = x.shape
    assert fused["n_state"] == C
    w = fused["w"]                      # (C, Nout) mxu dtype
    b = fused["b"]                      # (1, Nout) f32
    n_out = w.shape[1]
    n_rows = B * T
    out_dtype = x.dtype

    x2 = x.reshape(n_rows, C)           # no cast / no lane padding in the wrapper

    xb = x2.dtype.itemsize
    wb = w.dtype.itemsize
    ob = jnp.dtype(out_dtype).itemsize

    # ---- VMEM budget from hardware info (v5e/v6e 128 MiB, v7x 64 MiB) -------
    try:
        info = pltpu.get_tpu_info()
        vmem_cap = int(getattr(info, "vmem_capacity_bytes", 64 * 2**20))
    except Exception:  # pragma: no cover - conservative fallback
        vmem_cap = 64 * 2**20
    vmem_cap = max(vmem_cap, 32 * 2**20)
    budget = int(0.75 * vmem_cap)

    # ---- path 1: fused weight fully resident in VMEM (preferred) ------------
    w_foot = 2 * C * n_out * wb + 2 * n_out * 4            # conservative 2x buffering
    per_row = 2 * (C * xb + n_out * ob)                    # double-buffered x + out rows
    resident = (w_foot + 8 * per_row) <= budget

    if resident:
        tm_cap = min(max_row_tile, max(8, (budget - w_foot) // per_row))
        if n_rows <= tm_cap:
            tm = n_rows                                     # full-dim block, no row pad
        else:
            tm = max(8, (tm_cap // 8) * 8)
        rows_pad = _round_up(n_rows, tm)
        grid = (rows_pad // tm,)
        in_specs = [
            pl.BlockSpec((tm, C), lambda i: (i, 0)),        # x row tile (full K)
            pl.BlockSpec((C, n_out), lambda i: (0, 0)),     # constant -> fetched once
            pl.BlockSpec((1, n_out), lambda i: (0, 0)),     # fused bias, resident
        ]
        out_spec = pl.BlockSpec((tm, n_out), lambda i: (i, 0))
        semantics = ("parallel",)
        x_refetch = 1
    else:
        # ---- path 2: stream weight column tiles (weight on the OUTER axis so
        # each column tile is DMA'd exactly once; x row tiles are re-read).
        tn = 128
        for cand in (512, 256, 128):                        # prefer 256+ for 2x256 MXUs
            if n_out % cand == 0:
                tn = cand
                break
        w_tile = 2 * C * tn * wb + 2 * tn * 4
        per_row = 2 * (C * xb + tn * ob)
        tm_cap = min(max_row_tile, max(8, (budget - w_tile) // per_row))
        if n_rows <= tm_cap:
            tm = n_rows
        else:
            tm = max(8, (tm_cap // 8) * 8)
        rows_pad = _round_up(n_rows, tm)
        grid = (n_out // tn, rows_pad // tm)                # j outer, i inner
        in_specs = [
            pl.BlockSpec((tm, C), lambda j, i: (i, 0)),
            pl.BlockSpec((C, tn), lambda j, i: (0, j)),     # changes only with j
            pl.BlockSpec((1, tn), lambda j, i: (0, j)),
        ]
        out_spec = pl.BlockSpec((tm, tn), lambda j, i: (i, j))
        semantics = ("parallel", "parallel")
        x_refetch = n_out // tn

    if rows_pad != n_rows:
        x2 = jnp.pad(x2, ((0, rows_pad - n_rows), (0, 0)))  # row-only pad, only if ragged

    cost = pl.CostEstimate(
        flops=2 * rows_pad * C * n_out,
        transcendentals=0,
        bytes_accessed=(rows_pad * C * xb * x_refetch       # x (re-)reads per blocking
                        + C * n_out * wb + n_out * 4        # fused weight + bias, once
                        + rows_pad * n_out * ob),           # output writes
    )

    out = pl.pallas_call(
        _fused_proj_kernel,
        out_shape=jax.ShapeDtypeStruct((rows_pad, n_out), out_dtype),
        grid_spec=pltpu.PrefetchScalarGridSpec(
            num_scalar_prefetch=0,
            grid=grid,
            in_specs=in_specs,
            out_specs=out_spec,
        ),
        compiler_params=pltpu.CompilerParams(
            dimension_semantics=semantics,
            vmem_limit_bytes=budget,
        ),
        cost_estimate=cost,
    )(x2, w, b)

    if rows_pad != n_rows or n_out != C:
        out = out[:n_rows, :C]
    return out.reshape(B, T, C)


def init_params(key, n_state):
    """Deterministic init mimicking nn.Linear default U(-1/sqrt(in), 1/sqrt(in))."""
    ks = jax.random.split(key, 7)
    bound = 1.0 / jnp.sqrt(n_state)
    u = lambda k, shape: jax.random.uniform(k, shape, jnp.float32, -bound, bound)
    return {
        "wq": u(ks[0], (n_state, n_state)),  # (out, in) like torch
        "bq": u(ks[1], (n_state,)),
        "wk": u(ks[2], (n_state, n_state)),  # kept for completeness (dead in fwd return)
        "wv": u(ks[3], (n_state, n_state)),
        "bv": u(ks[4], (n_state,)),
        "wo": u(ks[5], (n_state, n_state)),
        "bo": u(ks[6], (n_state,)),
    }


if __name__ == "__main__":
    key = jax.random.PRNGKey(0)
    B, T, Ta, n_state, n_head = 2, 8, 8, 32, 4

    kx, kxa, kp = jax.random.split(key, 3)
    x = jax.random.normal(kx, (B, T, n_state), jnp.float32)
    xa = jax.random.normal(kxa, (B, Ta, n_state), jnp.float32)
    params = init_params(kp, n_state)

    # pure-JAX reference of the module's return value (two chained linears)
    q_ref = x @ params["wq"].T + params["bq"]
    ref = q_ref @ params["wo"].T + params["bo"]

    # default path: bf16 MXU operands, f32 accumulation (looser tolerance)
    fused_bf16 = fuse_ait_mha_params(params)                      # computed once, reused
    out = jax.block_until_ready(ait_mha_forward(x, xa, fused_bf16))
    assert out.shape == (B, T, n_state)
    assert jnp.allclose(out, ref, atol=5e-2, rtol=5e-2), float(jnp.max(jnp.abs(out - ref)))

    # f32 MXU path (fusion only reorders f32 rounding) -- tight tolerance
    fused_f32 = fuse_ait_mha_params(params, mxu_dtype=jnp.float32)
    out_f32 = jax.block_until_ready(ait_mha_forward(x, xa, fused_f32))
    assert jnp.allclose(out_f32, ref, atol=1e-4, rtol=1e-4), float(jnp.max(jnp.abs(out_f32 - ref)))

    print("KERNEL_OK")
</pallas_src>

<mosaic_0001>
module attributes {stable_mosaic.version = 11 : i64} {
  func.func @_fused_proj_kernel(%arg0: i32, %arg1: memref<16x32xf32, #tpu.memory_space<vmem>>, %arg2: memref<32x128xbf16, #tpu.memory_space<vmem>>, %arg3: memref<1x128xf32, #tpu.memory_space<vmem>>, %arg4: memref<16x128xf32, #tpu.memory_space<vmem>>) attributes {dimension_semantics = [#tpu.dimension_semantics<parallel>], iteration_bounds = array<i64: 1>, scalar_prefetch = 0 : i64, scratch_operands = 0 : i64, tpu.core_type = #tpu.core_type<tc>, window_params = [{transform_indices = @transform_0, window_bounds = array<i64: 16, 32>}, {pipeline_mode = #tpu.pipeline_mode<synchronous>, transform_indices = @transform_1, window_bounds = array<i64: 32, 128>}, {pipeline_mode = #tpu.pipeline_mode<synchronous>, transform_indices = @transform_2, window_bounds = array<i64: 1, 128>}, {transform_indices = @transform_3, window_bounds = array<i64: 16, 128>}]} {
    %c0 = arith.constant 0 : index
    %c0_0 = arith.constant 0 : index
    %0 = vector.load %arg1[%c0, %c0_0] : memref<16x32xf32, #tpu.memory_space<vmem>>, vector<16x32xf32>
    %1 = arith.truncf %0 : vector<16x32xf32> to vector<16x32xbf16>
    %c0_1 = arith.constant 0 : index
    %c0_2 = arith.constant 0 : index
    %2 = vector.load %arg2[%c0_1, %c0_2] : memref<32x128xbf16, #tpu.memory_space<vmem>>, vector<32x128xbf16>
    %cst = arith.constant dense<0.000000e+00> : vector<16x128xf32>
    %3 = tpu.matmul %1, %2, %cst {dimension_numbers = #tpu.dot_dimension_numbers<[1], [0], [0], [1], [0, 0, 1, 1], [], []>} : vector<16x32xbf16>, vector<32x128xbf16>, vector<16x128xf32> -> vector<16x128xf32>
    %c0_3 = arith.constant 0 : index
    %c0_4 = arith.constant 0 : index
    %4 = vector.load %arg3[%c0_3, %c0_4] : memref<1x128xf32, #tpu.memory_space<vmem>>, vector<1x128xf32>
    %5 = vector.broadcast %4 : vector<1x128xf32> to vector<16x128xf32>
    %6 = arith.addf %3, %5 : vector<16x128xf32>
    %c0_5 = arith.constant 0 : index
    %c0_6 = arith.constant 0 : index
    %7 = vector.load %arg4[%c0_5, %c0_6] : memref<16x128xf32, #tpu.memory_space<vmem>>, vector<16x128xf32>
    tpu.vector_store %arg4[%c0_5, %c0_6], %6 {strides = array<i32>} : memref<16x128xf32, #tpu.memory_space<vmem>>, vector<16x128xf32>,
    return
  }
  func.func @transform_0(%arg0: i32) -> (i32, i32) {
    %c0_i32 = arith.constant 0 : i32
    %c0_i32_0 = arith.constant 0 : i32
    return %arg0, %c0_i32 : i32, i32
  }
  func.func @transform_1(%arg0: i32) -> (i32, i32) {
    %c0_i32 = arith.constant 0 : i32
    %c0_i32_0 = arith.constant 0 : i32
    %c0_i32_1 = arith.constant 0 : i32
    return %c0_i32, %c0_i32_0 : i32, i32
  }
  func.func @transform_2(%arg0: i32) -> (i32, i32) {
    %c0_i32 = arith.constant 0 : i32
    %c0_i32_0 = arith.constant 0 : i32
    %c0_i32_1 = arith.constant 0 : i32
    return %c0_i32, %c0_i32_0 : i32, i32
  }
  func.func @transform_3(%arg0: i32) -> (i32, i32) {
    %c0_i32 = arith.constant 0 : i32
    %c0_i32_0 = arith.constant 0 : i32
    return %arg0, %c0_i32 : i32, i32
  }
}

</mosaic_0001>

<llo_original>
// kernel: tpu_custom_call.1
$region0: #{tpu_custom_call.1}
  #allocation0 [shape = 'u32[]', space=smem, size = 0x4, offset = 0x4, fixed_abs, tag = 'smem constant byte address 0x4 - core index']
  #allocation1 [shape = 'u32[144,128]{1,0:T(1,128)}', space=vmem, size = 0x12000, scoped, tag = 'internal scratch']
  %s0 = inlined_call_operand.hbm [shape: f32[16,32], index: 0, kind: input, shape index: {}]
  %s1 = inlined_call_operand.hbm [shape: bf16[32,128], index: 1, kind: input, shape index: {}]
  %s2 = inlined_call_operand.vmem [shape: f32[1,128], index: 2, kind: input, shape index: {}]
  %s3 = inlined_call_operand.hbm [shape: f32[16,128], index: 3, kind: output, shape index: {}]
  %s4 = sld [smem:[#allocation0]]
  $region30: #{tpu_custom_call.1} parent=0
    _
  %s6 = ssub.s32 1, %s4
  %s7 = scalar_select 0, %s6, %s4
  $region1: #{tpu_custom_call.1} parent=0
    #allocation2 [shape = 'u8[8192]{0}', space=vmem, size = 0x2000, scoped, tag = 'input window, operand 0, single buffered']
    #allocation3 [shape = 's32[1]{0}', space=sflag, size = 0x4, scoped, tag = 'scoped memory for tpu_custom_call.1']
    #allocation4 [shape = 's32[1]{0}', space=sflag, size = 0x4, scoped, tag = 'scoped memory for tpu_custom_call.1']
    #allocation5 [shape = 'u8[8192]{0}', space=vmem, size = 0x2000, scoped, tag = 'input window, operand 1, single buffered']
    #allocation6 [shape = 's32[1]{0}', space=sflag, size = 0x4, scoped, tag = 'scoped memory for tpu_custom_call.1']
    #allocation7 [shape = 'u8[8192]{0}', space=vmem, size = 0x2000, scoped, tag = 'output window, operand 0, single buffered']
    %8 = vsyncpa [#allocation3], 0
    %9 = vsyncpa [#allocation6], 0
    %10 = vsyncpa [#allocation4], 0
    // Predicated region
    $region2: #{tpu_custom_call.1} parent=1 // pred_check
      _
    $region3: #{tpu_custom_call.1} parent=1 // pred_check_branch
      %12 = sbr.rel (0) target = $region5
    $region4: #{tpu_custom_call.1} parent=1 // pred_region
      %s14 = ssub.s32 256, 256
      %15 = vsyncadd [#allocation3], %s14
      %s16 = sshll.u32 [#allocation2], 4
      %s17 = int_to_ptr.vmem [resolvable:$true] %s16
      %22 = dma.hbm_to_vmem [thread:$0]  %s0, 256, %s17, [#allocation3], 128, 128, 8
    $region5: #{tpu_custom_call.1} parent=1 // pred_fallthru
      _
    // Predicated region
    $region6: #{tpu_custom_call.1} parent=1 // pred_check
      _
    $region7: #{tpu_custom_call.1} parent=1 // pred_check_branch
      %24 = sbr.rel (0) target = $region9
    $region8: #{tpu_custom_call.1} parent=1 // pred_region
      %s26 = ssub.s32 256, 256
      %27 = vsyncadd [#allocation6], %s26
      %s28 = sshll.u32 [#allocation5], 4
      %s29 = int_to_ptr.vmem [resolvable:$true] %s28
      %34 = dma.hbm_to_vmem [thread:$0]  %s1, 256, %s29, [#allocation6], 64, 64, 4
    $region9: #{tpu_custom_call.1} parent=1 // pred_fallthru
      _
    // Predicated region
    $region10: #{tpu_custom_call.1} parent=1 // pred_check
      _
    $region11: #{tpu_custom_call.1} parent=1 // pred_check_branch
      %36 = sbr.rel (0) target = $region13
    $region12: #{tpu_custom_call.1} parent=1 // pred_region
      _
    $region13: #{tpu_custom_call.1} parent=1 // pred_fallthru
      _
    // Predicated region
    $region14: #{tpu_custom_call.1} parent=1 // pred_check
      _
    $region15: #{tpu_custom_call.1} parent=1 // pred_check_branch
      %38 = sbr.rel (0) target = $region17
    $region16: #{tpu_custom_call.1} parent=1 // pred_region
      %39 = dma.done [#allocation3], 256
    $region17: #{tpu_custom_call.1} parent=1 // pred_fallthru
      _
    // Predicated region
    $region18: #{tpu_custom_call.1} parent=1 // pred_check
      _
    $region19: #{tpu_custom_call.1} parent=1 // pred_check_branch
      %41 = sbr.rel (0) target = $region21
    $region20: #{tpu_custom_call.1} parent=1 // pred_region
      %42 = dma.done [#allocation6], 256
    $region21: #{tpu_custom_call.1} parent=1 // pred_fallthru
      _
    %v44 = vld [vmem:[#allocation2] sm:$0xff]
    %v45 = vld [vmem:[#allocation2 + $0x8] sm:$0xff]
    %v46 = vpack.c.bf16 %v45, %v44
    %v47 = vld [vmem:[#allocation5] sm:$0xf]
    %v48 = vld [vmem:[#allocation5 + $0x4] sm:$0xf]
    %v49 = vld [vmem:[#allocation5 + $0x8] sm:$0xf]
    %v50 = vld [vmem:[#allocation5 + $0xc] sm:$0xf]
    %v51 = vld [vmem:[%s2] sm:$0x1]
    %v53 = vlaneseq
    %v54 = vshrl.u32 %v53, 7
    %v55 = vsub.s32 0, %v54
    %v56 = vrot.slane %v51, %v55
    %v62 = vunpack.c.l.b16 %v47
    %v63 = vunpack.c.l.b16 %v48
    %v64 = vunpack.c.l.b16 %v49
    %v65 = vunpack.c.l.b16 %v50
    %v66 = vpack.c.b16 %v63, %v62
    %v67 = vpack.c.b16 %v65, %v64
    %vm70 = vcmask 261120
    %v72 = vsel %vm70, %v46, 0
    %74 = vmatprep.subr.bf16.mxu0 0
    %75 = vmatpush1.bf16.msra.mxu0 %v66
    %76 = vmatprep.subr.bf16.mxu0 0
    %77 = vmatpush1.bf16.msra.mxu0 %v67
    %78 = vmatprep.subr.bf16.mxu0 0
    %79 = vmatpush1.bf16.msra.mxu0 0
    %80 = vmatprep.subr.bf16.mxu0 0
    %81 = vmatpush1.bf16.msra.mxu0 0
    %82 = vmatprep.subr.bf16.mxu0 0
    %83 = vmatpush1.bf16.msra.mxu0 0
    %84 = vmatprep.subr.bf16.mxu0 0
    %85 = vmatpush1.bf16.msra.mxu0 0
    %86 = vmatprep.subr.bf16.mxu0 0
    %87 = vmatpush1.bf16.msra.mxu0 0
    %88 = vmatprep.subr.bf16.mxu0 0
    %89 = vmatpush1.bf16.msra.mxu0 0
    %90 = vmatprep.subr.bf16.mxu0 0
    %91 = vmatpush1.bf16.msra.mxu0 0
    %92 = vmatprep.subr.bf16.mxu0 0
    %93 = vmatpush1.bf16.msra.mxu0 0
    %94 = vmatprep.subr.bf16.mxu0 0
    %95 = vmatpush1.bf16.msra.mxu0 0
    %96 = vmatprep.subr.bf16.mxu0 0
    %97 = vmatpush1.bf16.msra.mxu0 0
    %98 = vmatprep.subr.bf16.mxu0 0
    %99 = vmatpush1.bf16.msra.mxu0 0
    %100 = vmatprep.subr.bf16.mxu0 0
    %101 = vmatpush1.bf16.msra.mxu0 0
    %102 = vmatprep.subr.bf16.mxu0 0
    %103 = vmatpush1.bf16.msra.mxu0 0
    %104 = vmatprep.subr.bf16.mxu0 0
    %105 = vmatpush1.bf16.msra.mxu0 0
    %106 = vmatprep.mubr.bf16.mxu0 0
    %107 = vmatmul.mubr.bf16.gmra.mrb[0].mxu0 %v72
    %v108 = vpop.f32.mrb[0].mxu0
    %v109 = vadd.f32 %v56, %v108
    %v110 = vpop.f32.mrb[0].mxu0
    %v111 = vpop.f32.mrb[0].mxu0
    %v112 = vadd.f32 %v56, %v111
    %v113 = vpop.f32.mrb[0].mxu0
    %114 = vdwg.mxu0
    %115 = vst [vmem:[#allocation7] sm:$0xff] %v109
    %116 = vst [vmem:[#allocation7 + $0x8] sm:$0xff] %v112
    // Predicated region
    $region22: #{tpu_custom_call.1} parent=1 // pred_check
      _
    $region23: #{tpu_custom_call.1} parent=1 // pred_check_branch
      %118 = sbr.rel (0) target = $region25
    $region24: #{tpu_custom_call.1} parent=1 // pred_region
      %s120 = ssub.s32 256, 256
      %121 = vsyncadd [#allocation4], %s120
      %s122 = sshll.u32 [#allocation7], 4
      %s123 = int_to_ptr.vmem [resolvable:$true] %s122
      %128 = dma.vmem_to_hbm [thread:$0]  %s123, 256, %s3, [#allocation4], 128, 128, 8
    $region25: #{tpu_custom_call.1} parent=1 // pred_fallthru
      _
    // Predicated region
    $region26: #{tpu_custom_call.1} parent=1 // pred_check
      _
    $region27: #{tpu_custom_call.1} parent=1 // pred_check_branch
      %130 = sbr.rel (0) target = $region29
    $region28: #{tpu_custom_call.1} parent=1 // pred_region
      %131 = dma.done [#allocation4], 256
    $region29: #{tpu_custom_call.1} parent=1 // pred_fallthru
      _
    %132 = vsyncpa [#allocation3], 1
    %133 = vsyncpa [#allocation6], 1
    %134 = vsyncpa [#allocation4], 1

</llo_original>
